<compile_context>
chip_gen: v6e
topology: v6e:2x2x1
jax: 0.10.0
libtpu: 0.0.40
codegen_flags: <defaults>
</compile_context>

<pallas_src>
import jax
import jax.numpy as jnp
from jax.experimental import pallas as pl
from jax.experimental.pallas import tpu as pltpu


def _round_up(x, m):
    return (x + m - 1) // m * m


def mlp_kernel(x_ref, w1_ref, b1_ref, w2_ref, b2_ref, w3_ref, b3_ref, o_ref):
    # x_ref: [F, T], w*_ref: [out, in], b*_ref: [out, 1], o_ref: [O, T]
    tile = x_ref.shape[-1]
    hidden = w1_ref.shape[0]

    # Layer 1: [H, F] @ [F, T] + [H, 1] -> tanh
    h = jnp.tanh(
        jnp.dot(w1_ref[...], x_ref[...], preferred_element_type=jnp.float32)
        + b1_ref[...]
    )

    # Five repeated hidden layers sharing W_2 / b_2 (exactly as in the torch
    # forward). Hoist the bias broadcast out of the unrolled loop (JAX does
    # not CSE broadcast_in_dim).
    w2 = w2_ref[...]
    b2b = jnp.broadcast_to(b2_ref[...], (hidden, tile))
    for _ in range(5):
        h = jnp.tanh(jnp.dot(w2, h, preferred_element_type=jnp.float32) + b2b)

    # Output layer (no activation): [O, H] @ [H, T] + [O, 1]
    out = jnp.dot(w3_ref[...], h, preferred_element_type=jnp.float32) + b3_ref[...]
    o_ref[...] = out.astype(o_ref.dtype)


def net_forward(x, y, params, tile=2048):
    """x, y: [N] float32.  Returns [N, num_output] (matching the torch module)."""
    W1, b1, W2, b2, W3, b3 = params
    n = x.shape[0]
    num_feat = W1.shape[1]
    num_hidden = W1.shape[0]
    num_out = W3.shape[0]

    # Batch on lanes: input block is [F, N].
    xin = jnp.stack((x, y), axis=0).astype(jnp.float32)

    # Lane tile: multiple of 128, clamped for small N; pad batch to full grid.
    tile = min(tile, max(128, _round_up(n, 128)))
    n_pad = _round_up(n, tile)
    if n_pad != n:
        xin = jnp.pad(xin, ((0, 0), (0, n_pad - n)))
    num_tiles = n_pad // tile

    cost = pl.CostEstimate(
        flops=2 * n_pad * (num_feat * num_hidden
                           + 5 * num_hidden * num_hidden
                           + num_hidden * num_out),
        transcendentals=6 * num_hidden * n_pad,
        bytes_accessed=4 * (n_pad * (num_feat + num_out)
                            + num_hidden * (num_feat + num_hidden + num_out)
                            + 2 * num_hidden + num_out),
    )

    def const_spec(a):
        # Full-array block, constant index -> DMA'd once, stays VMEM-resident.
        return pl.BlockSpec(a.shape, lambda i: (0,) * a.ndim)

    out = pl.pallas_call(
        mlp_kernel,
        out_shape=jax.ShapeDtypeStruct((num_out, n_pad), jnp.float32),
        grid=(num_tiles,),
        in_specs=[
            pl.BlockSpec((num_feat, tile), lambda i: (0, i)),
            const_spec(W1), const_spec(b1),
            const_spec(W2), const_spec(b2),
            const_spec(W3), const_spec(b3),
        ],
        out_specs=pl.BlockSpec((num_out, tile), lambda i: (0, i)),
        compiler_params=pltpu.CompilerParams(
            dimension_semantics=("parallel",),
            vmem_limit_bytes=32 * 1024 * 1024,
        ),
        cost_estimate=cost,
    )(xin, W1, b1, W2, b2, W3, b3)

    # [O, N_pad] -> [N, O] to match the PyTorch output layout.
    return out[:, :n].T


def xavier_normal(key, fan_out, fan_in):
    # torch.nn.init.xavier_normal_ on a Tensor(fan_out, fan_in)
    std = (2.0 / (fan_in + fan_out)) ** 0.5
    return std * jax.random.normal(key, (fan_out, fan_in), dtype=jnp.float32)


def init_params(key, num_hidden, num_features, num_output):
    k1, k2, k3 = jax.random.split(key, 3)
    W_1 = xavier_normal(k1, num_hidden, num_features)   # [H, F]
    W_2 = xavier_normal(k2, num_hidden, num_hidden)     # [H, H]
    W_3 = xavier_normal(k3, num_output, num_hidden)     # [O, H]
    b_1 = jnp.zeros((num_hidden, 1), jnp.float32)       # [H, 1] column bias
    b_2 = jnp.zeros((num_hidden, 1), jnp.float32)
    b_3 = jnp.zeros((num_output, 1), jnp.float32)
    return (W_1, b_1, W_2, b_2, W_3, b_3)


def reference_forward(x, y, params):
    W1, b1, W2, b2, W3, b3 = params
    h = jnp.stack((x, y), axis=1).astype(jnp.float32)   # [N, 2]
    h = jnp.tanh(h @ W1.T + b1[:, 0])
    for _ in range(5):
        h = jnp.tanh(h @ W2.T + b2[:, 0])
    return h @ W3.T + b3[:, 0]


if __name__ == "__main__":
    num_hidden, num_features, num_output = 32, 2, 1
    N = 300   # deliberately not a multiple of 128 to exercise padding

    key = jax.random.PRNGKey(0)
    kx, ky, kp = jax.random.split(key, 3)
    x = jax.random.normal(kx, (N,), dtype=jnp.float32)
    y = jax.random.normal(ky, (N,), dtype=jnp.float32)

    params = init_params(kp, num_hidden, num_features, num_output)

    # tile=128 -> 3 grid steps, exercising the pipelined multi-tile path.
    out = net_forward(x, y, params, tile=128)
    out = jax.block_until_ready(out)

    ref = reference_forward(x, y, params)
    assert out.shape == (N, num_output), out.shape
    assert jnp.allclose(out, ref, atol=1e-5, rtol=1e-5), (out, ref)

    print("KERNEL_OK")
</pallas_src>

<mosaic_0001>
module attributes {stable_mosaic.version = 11 : i64} {
  func.func @mlp_kernel(%arg0: i32, %arg1: memref<2x128xf32, #tpu.memory_space<vmem>>, %arg2: memref<32x2xf32, #tpu.memory_space<vmem>>, %arg3: memref<32x1xf32, #tpu.memory_space<vmem>>, %arg4: memref<32x32xf32, #tpu.memory_space<vmem>>, %arg5: memref<32x1xf32, #tpu.memory_space<vmem>>, %arg6: memref<1x32xf32, #tpu.memory_space<vmem>>, %arg7: memref<1x1xf32, #tpu.memory_space<vmem>>, %arg8: memref<1x128xf32, #tpu.memory_space<vmem>>) attributes {dimension_semantics = [#tpu.dimension_semantics<parallel>], iteration_bounds = array<i64: 3>, scalar_prefetch = 0 : i64, scratch_operands = 0 : i64, tpu.core_type = #tpu.core_type<tc>, window_params = [{transform_indices = @transform_0, window_bounds = array<i64: 2, 128>}, {pipeline_mode = #tpu.pipeline_mode<synchronous>, transform_indices = @transform_1, window_bounds = array<i64: 32, 2>}, {pipeline_mode = #tpu.pipeline_mode<synchronous>, transform_indices = @transform_2, window_bounds = array<i64: 32, 1>}, {pipeline_mode = #tpu.pipeline_mode<synchronous>, transform_indices = @transform_3, window_bounds = array<i64: 32, 32>}, {pipeline_mode = #tpu.pipeline_mode<synchronous>, transform_indices = @transform_4, window_bounds = array<i64: 32, 1>}, {pipeline_mode = #tpu.pipeline_mode<synchronous>, transform_indices = @transform_5, window_bounds = array<i64: 1, 32>}, {pipeline_mode = #tpu.pipeline_mode<synchronous>, transform_indices = @transform_6, window_bounds = array<i64: 1, 1>}, {transform_indices = @transform_7, window_bounds = array<i64: 1, 128>}]} {
    %c0 = arith.constant 0 : index
    %c0_0 = arith.constant 0 : index
    %0 = vector.load %arg2[%c0, %c0_0] : memref<32x2xf32, #tpu.memory_space<vmem>>, vector<32x2xf32>
    %c0_1 = arith.constant 0 : index
    %c0_2 = arith.constant 0 : index
    %1 = vector.load %arg1[%c0_1, %c0_2] : memref<2x128xf32, #tpu.memory_space<vmem>>, vector<2x128xf32>
    %cst = arith.constant dense<0.000000e+00> : vector<32x128xf32>
    %2 = tpu.matmul %0, %1, %cst {dimension_numbers = #tpu.dot_dimension_numbers<[1], [0], [0], [1], [0, 0, 1, 1], [], []>} : vector<32x2xf32>, vector<2x128xf32>, vector<32x128xf32> -> vector<32x128xf32>
    %c0_3 = arith.constant 0 : index
    %c0_4 = arith.constant 0 : index
    %3 = vector.load %arg3[%c0_3, %c0_4] : memref<32x1xf32, #tpu.memory_space<vmem>>, vector<32x1xf32>
    %4 = vector.broadcast %3 : vector<32x1xf32> to vector<32x128xf32>
    %5 = arith.addf %2, %4 : vector<32x128xf32>
    %6 = math.tanh %5 : vector<32x128xf32>
    %c0_5 = arith.constant 0 : index
    %c0_6 = arith.constant 0 : index
    %7 = vector.load %arg4[%c0_5, %c0_6] : memref<32x32xf32, #tpu.memory_space<vmem>>, vector<32x32xf32>
    %c0_7 = arith.constant 0 : index
    %c0_8 = arith.constant 0 : index
    %8 = vector.load %arg5[%c0_7, %c0_8] : memref<32x1xf32, #tpu.memory_space<vmem>>, vector<32x1xf32>
    %9 = vector.shape_cast %8 : vector<32x1xf32> to vector<32x1xf32>
    %10 = vector.broadcast %9 : vector<32x1xf32> to vector<32x128xf32>
    %cst_9 = arith.constant dense<0.000000e+00> : vector<32x128xf32>
    %11 = tpu.matmul %7, %6, %cst_9 {dimension_numbers = #tpu.dot_dimension_numbers<[1], [0], [0], [1], [0, 0, 1, 1], [], []>} : vector<32x32xf32>, vector<32x128xf32>, vector<32x128xf32> -> vector<32x128xf32>
    %12 = arith.addf %11, %10 : vector<32x128xf32>
    %13 = math.tanh %12 : vector<32x128xf32>
    %cst_10 = arith.constant dense<0.000000e+00> : vector<32x128xf32>
    %14 = tpu.matmul %7, %13, %cst_10 {dimension_numbers = #tpu.dot_dimension_numbers<[1], [0], [0], [1], [0, 0, 1, 1], [], []>} : vector<32x32xf32>, vector<32x128xf32>, vector<32x128xf32> -> vector<32x128xf32>
    %15 = arith.addf %14, %10 : vector<32x128xf32>
    %16 = math.tanh %15 : vector<32x128xf32>
    %cst_11 = arith.constant dense<0.000000e+00> : vector<32x128xf32>
    %17 = tpu.matmul %7, %16, %cst_11 {dimension_numbers = #tpu.dot_dimension_numbers<[1], [0], [0], [1], [0, 0, 1, 1], [], []>} : vector<32x32xf32>, vector<32x128xf32>, vector<32x128xf32> -> vector<32x128xf32>
    %18 = arith.addf %17, %10 : vector<32x128xf32>
    %19 = math.tanh %18 : vector<32x128xf32>
    %cst_12 = arith.constant dense<0.000000e+00> : vector<32x128xf32>
    %20 = tpu.matmul %7, %19, %cst_12 {dimension_numbers = #tpu.dot_dimension_numbers<[1], [0], [0], [1], [0, 0, 1, 1], [], []>} : vector<32x32xf32>, vector<32x128xf32>, vector<32x128xf32> -> vector<32x128xf32>
    %21 = arith.addf %20, %10 : vector<32x128xf32>
    %22 = math.tanh %21 : vector<32x128xf32>
    %cst_13 = arith.constant dense<0.000000e+00> : vector<32x128xf32>
    %23 = tpu.matmul %7, %22, %cst_13 {dimension_numbers = #tpu.dot_dimension_numbers<[1], [0], [0], [1], [0, 0, 1, 1], [], []>} : vector<32x32xf32>, vector<32x128xf32>, vector<32x128xf32> -> vector<32x128xf32>
    %24 = arith.addf %23, %10 : vector<32x128xf32>
    %25 = math.tanh %24 : vector<32x128xf32>
    %c0_14 = arith.constant 0 : index
    %c0_15 = arith.constant 0 : index
    %26 = vector.load %arg6[%c0_14, %c0_15] : memref<1x32xf32, #tpu.memory_space<vmem>>, vector<1x32xf32>
    %cst_16 = arith.constant dense<0.000000e+00> : vector<1x128xf32>
    %27 = tpu.matmul %26, %25, %cst_16 {dimension_numbers = #tpu.dot_dimension_numbers<[1], [0], [0], [1], [0, 0, 1, 1], [], []>} : vector<1x32xf32>, vector<32x128xf32>, vector<1x128xf32> -> vector<1x128xf32>
    %c0_17 = arith.constant 0 : index
    %c0_18 = arith.constant 0 : index
    %28 = vector.load %arg7[%c0_17, %c0_18] : memref<1x1xf32, #tpu.memory_space<vmem>>, vector<1x1xf32>
    %29 = vector.broadcast %28 : vector<1x1xf32> to vector<1x128xf32>
    %30 = arith.addf %27, %29 : vector<1x128xf32>
    %c0_19 = arith.constant 0 : index
    %c0_20 = arith.constant 0 : index
    %31 = vector.load %arg8[%c0_19, %c0_20] : memref<1x128xf32, #tpu.memory_space<vmem>>, vector<1x128xf32>
    tpu.vector_store %arg8[%c0_19, %c0_20], %30 {strides = array<i32>} : memref<1x128xf32, #tpu.memory_space<vmem>>, vector<1x128xf32>,
    return
  }
  func.func @transform_0(%arg0: i32) -> (i32, i32) {
    %c0_i32 = arith.constant 0 : i32
    %c0_i32_0 = arith.constant 0 : i32
    return %c0_i32, %arg0 : i32, i32
  }
  func.func @transform_1(%arg0: i32) -> (i32, i32) {
    %c0_i32 = arith.constant 0 : i32
    %c0_i32_0 = arith.constant 0 : i32
    %c0_i32_1 = arith.constant 0 : i32
    return %c0_i32, %c0_i32_0 : i32, i32
  }
  func.func @transform_2(%arg0: i32) -> (i32, i32) {
    %c0_i32 = arith.constant 0 : i32
    %c0_i32_0 = arith.constant 0 : i32
    %c0_i32_1 = arith.constant 0 : i32
    return %c0_i32, %c0_i32_0 : i32, i32
  }
  func.func @transform_3(%arg0: i32) -> (i32, i32) {
    %c0_i32 = arith.constant 0 : i32
    %c0_i32_0 = arith.constant 0 : i32
    %c0_i32_1 = arith.constant 0 : i32
    return %c0_i32, %c0_i32_0 : i32, i32
  }
  func.func @transform_4(%arg0: i32) -> (i32, i32) {
    %c0_i32 = arith.constant 0 : i32
    %c0_i32_0 = arith.constant 0 : i32
    %c0_i32_1 = arith.constant 0 : i32
    return %c0_i32, %c0_i32_0 : i32, i32
  }
  func.func @transform_5(%arg0: i32) -> (i32, i32) {
    %c0_i32 = arith.constant 0 : i32
    %c0_i32_0 = arith.constant 0 : i32
    %c0_i32_1 = arith.constant 0 : i32
    return %c0_i32, %c0_i32_0 : i32, i32
  }
  func.func @transform_6(%arg0: i32) -> (i32, i32) {
    %c0_i32 = arith.constant 0 : i32
    %c0_i32_0 = arith.constant 0 : i32
    %c0_i32_1 = arith.constant 0 : i32
    return %c0_i32, %c0_i32_0 : i32, i32
  }
  func.func @transform_7(%arg0: i32) -> (i32, i32) {
    %c0_i32 = arith.constant 0 : i32
    %c0_i32_0 = arith.constant 0 : i32
    return %c0_i32, %arg0 : i32, i32
  }
}

</mosaic_0001>

<llo_original>
// kernel: tpu_custom_call.1
$region0: #{tpu_custom_call.1}
  #allocation0 [shape = 'u32[]', space=smem, size = 0x4, offset = 0x4, fixed_abs, tag = 'smem constant byte address 0x4 - core index']
  #allocation1 [shape = 'u32[144,128]{1,0:T(1,128)}', space=vmem, size = 0x12000, scoped, tag = 'internal scratch']
  #allocation2 [shape = 'f32[1,1]{1,0:T(1,128)S(1)}', space=vmem, size = 0x200, scoped, tag = 'scoped memory for tpu_custom_call.1']
  %s0 = inlined_call_operand.vmem [shape: f32[2,384], index: 0, kind: input, shape index: {}]
  %s1 = inlined_call_operand.vmem [shape: f32[32,2], index: 1, kind: input, shape index: {}]
  %s2 = inlined_call_operand.vmem [shape: f32[32,1], index: 2, kind: input, shape index: {}]
  %s3 = inlined_call_operand.vmem [shape: f32[32,32], index: 3, kind: input, shape index: {}]
  %s4 = inlined_call_operand.vmem [shape: f32[32,1], index: 4, kind: input, shape index: {}]
  %s5 = inlined_call_operand.vmem [shape: f32[1,32], index: 5, kind: input, shape index: {}]
  %s6 = inlined_call_operand.<no memory space> [shape: f32[1,1], index: 6, kind: input, shape index: {}]
  %s7 = inlined_call_operand.hbm [shape: f32[1,384], index: 7, kind: output, shape index: {}]
  %s8 = sld [smem:[#allocation0]]
  $region61: #{tpu_custom_call.1} parent=0
    _
  %s10 = ssub.s32 1, %s8
  %s11 = scalar_select 0, %s10, %s8
  %v12 = vstv %s6
  %13 = vst [vmem:[#allocation2] sm:$0x1] %v12
  $region1: #{tpu_custom_call.1} parent=0
    #allocation3 [shape = 'u8[1024]{0}', space=vmem, size = 0x400, scoped, tag = 'output window, operand 0']
    #allocation4 [shape = 's32[2]{0}', space=sflag, size = 0x8, scoped, tag = 'scoped memory for tpu_custom_call.1']
    %14 = vsyncpa [#allocation4], 0
    %s15 = scalar_lea.sflag [#allocation4], 1
    %16 = vsyncpa %s15, 0
    loop: start=0, step=1, limit=5
    $region2: #{tpu_custom_call.1} parent=1 // loop_pre_header
      _
    $region3: #{tpu_custom_call.1} parent=1 // loop_header
      %s18 = sphi 0, %s22
      %p19 = scmp.ge.s32.totalorder %s18, 5
      %s28 = sphi 0, %s30
      %s31 = sphi 0, %s28
      %s32 = sphi 0, %s31
      %s48 = sphi 0, %s32
      %s52 = sphi 0, %s52
      %s54 = sphi 0, %s52
      %s55 = sphi 0, %s54
      %s69 = sphi 0, %s55
      %s73 = sphi 0, %s73
      %s75 = sphi 0, %s73
      %s76 = sphi 0, %s75
      %s90 = sphi 0, %s76
      %s94 = sphi 0, %s94
      %s96 = sphi 0, %s94
      %s97 = sphi 0, %s96
      %s111 = sphi 0, %s97
      %s115 = sphi 0, %s115
      %s117 = sphi 0, %s115
      %s118 = sphi 0, %s117
      %s132 = sphi 0, %s118
      %s136 = sphi 0, %s136
      %s138 = sphi 0, %s136
      %s139 = sphi 0, %s138
      %s153 = sphi 0, %s139
      %s157 = sphi 0, %s157
      %s159 = sphi 0, %s157
      %s160 = sphi 0, %s159
      %s174 = sphi 0, %s160
      %s180 = sphi 0, %s182
      %s183 = sphi 0, %s180
      %s184 = sphi 0, %s183
      %s200 = sphi 0, %s184
    $region4: #{tpu_custom_call.1} parent=1 // loop_header_branch
      %21 = sbr.rel (%p19) target = $region8
    $region5: #{tpu_custom_call.1} parent=1 // loop_body
      %s23 = ssub.s32 %s18, 1
      %s24 = ssub.s32 %s18, 2
      %s25 = sadd.s32 %s18, 1
      %s26 = ssub.s32 %s18, %s25
      %p27 = scmp.eq.s32.totalorder %s26, 0
      %s29 = sadd.s32 %s28, 1
      %s30 = scalar_select %p27, %s28, %s29
      %p33 = pneg %p27
      %p34 = scmp.eq.s32.totalorder %s18, 2
      %p35 = por %p33, %p34
      %p36 = scmp.ne.s32.totalorder %s28, %s31
      %p37 = scmp.eq.s32.totalorder %s18, 0
      %p38 = por %p36, %p37
      %p39 = scmp.ne.s32.totalorder %s28, %s31
      %p40 = scmp.eq.s32.totalorder %s23, 2
      %p41 = por %p39, %p40
      %p42 = scmp.ne.s32.totalorder %s31, %s32
      %p43 = scmp.eq.s32.totalorder %s23, 0
      %p44 = por %p42, %p43
      %p45 = scmp.ne.s32.totalorder %s31, %s32
      %p46 = scmp.eq.s32.totalorder %s24, 2
      %p47 = por %p45, %p46
      %p49 = scmp.ne.s32.totalorder %s32, %s48
      %p50 = scmp.eq.s32.totalorder %s24, 0
      %p51 = por %p49, %p50
      %s53 = sadd.s32 %s52, 1
      %p56 = scmp.eq.s32.totalorder %s18, 2
      %p57 = scmp.ne.s32.totalorder %s52, %s54
      %p58 = scmp.eq.s32.totalorder %s18, 0
      %p59 = por %p57, %p58
      %p60 = scmp.ne.s32.totalorder %s52, %s54
      %p61 = scmp.eq.s32.totalorder %s23, 2
      %p62 = por %p60, %p61
      %p63 = scmp.ne.s32.totalorder %s54, %s55
      %p64 = scmp.eq.s32.totalorder %s23, 0
      %p65 = por %p63, %p64
      %p66 = scmp.ne.s32.totalorder %s54, %s55
      %p67 = scmp.eq.s32.totalorder %s24, 2
      %p68 = por %p66, %p67
      %p70 = scmp.ne.s32.totalorder %s55, %s69
      %p71 = scmp.eq.s32.totalorder %s24, 0
      %p72 = por %p70, %p71
      %s74 = sadd.s32 %s73, 1
      %p77 = scmp.eq.s32.totalorder %s18, 2
      %p78 = scmp.ne.s32.totalorder %s73, %s75
      %p79 = scmp.eq.s32.totalorder %s18, 0
      %p80 = por %p78, %p79
      %p81 = scmp.ne.s32.totalorder %s73, %s75
      %p82 = scmp.eq.s32.totalorder %s23, 2
      %p83 = por %p81, %p82
      %p84 = scmp.ne.s32.totalorder %s75, %s76
      %p85 = scmp.eq.s32.totalorder %s23, 0
      %p86 = por %p84, %p85
      %p87 = scmp.ne.s32.totalorder %s75, %s76
      %p88 = scmp.eq.s32.totalorder %s24, 2
      %p89 = por %p87, %p88
      %p91 = scmp.ne.s32.totalorder %s76, %s90
      %p92 = scmp.eq.s32.totalorder %s24, 0
      %p93 = por %p91, %p92
      %s95 = sadd.s32 %s94, 1
      %p98 = scmp.eq.s32.totalorder %s18, 2
      %p99 = scmp.ne.s32.totalorder %s94, %s96
      %p100 = scmp.eq.s32.totalorder %s18, 0
      %p101 = por %p99, %p100
      %p102 = scmp.ne.s32.totalorder %s94, %s96
      %p103 = scmp.eq.s32.totalorder %s23, 2
      %p104 = por %p102, %p103
      %p105 = scmp.ne.s32.totalorder %s96, %s97
      %p106 = scmp.eq.s32.totalorder %s23, 0
      %p107 = por %p105, %p106
      %p108 = scmp.ne.s32.totalorder %s96, %s97
      %p109 = scmp.eq.s32.totalorder %s24, 2
      %p110 = por %p108, %p109
      %p112 = scmp.ne.s32.totalorder %s97, %s111
      %p113 = scmp.eq.s32.totalorder %s24, 0
      %p114 = por %p112, %p113
      %s116 = sadd.s32 %s115, 1
      %p119 = scmp.eq.s32.totalorder %s18, 2
      %p120 = scmp.ne.s32.totalorder %s115, %s117
      %p121 = scmp.eq.s32.totalorder %s18, 0
      %p122 = por %p120, %p121
      %p123 = scmp.ne.s32.totalorder %s115, %s117
      %p124 = scmp.eq.s32.totalorder %s23, 2
      %p125 = por %p123, %p124
      %p126 = scmp.ne.s32.totalorder %s117, %s118
      %p127 = scmp.eq.s32.totalorder %s23, 0
      %p128 = por %p126, %p127
      %p129 = scmp.ne.s32.totalorder %s117, %s118
      %p130 = scmp.eq.s32.totalorder %s24, 2
      %p131 = por %p129, %p130
      %p133 = scmp.ne.s32.totalorder %s118, %s132
      %p134 = scmp.eq.s32.totalorder %s24, 0
      %p135 = por %p133, %p134
      %s137 = sadd.s32 %s136, 1
      %p140 = scmp.eq.s32.totalorder %s18, 2
      %p141 = scmp.ne.s32.totalorder %s136, %s138
      %p142 = scmp.eq.s32.totalorder %s18, 0
      %p143 = por %p141, %p142
      %p144 = scmp.ne.s32.totalorder %s136, %s138
      %p145 = scmp.eq.s32.totalorder %s23, 2
      %p146 = por %p144, %p145
      %p147 = scmp.ne.s32.totalorder %s138, %s139
      %p148 = scmp.eq.s32.totalorder %s23, 0
      %p149 = por %p147, %p148
      %p150 = scmp.ne.s32.totalorder %s138, %s139
      %p151 = scmp.eq.s32.totalorder %s24, 2
      %p152 = por %p150, %p151
      %p154 = scmp.ne.s32.totalorder %s139, %s153
      %p155 = scmp.eq.s32.totalorder %s24, 0
      %p156 = por %p154, %p155
      %s158 = sadd.s32 %s157, 1
      %p161 = scmp.eq.s32.totalorder %s18, 2
      %p162 = scmp.ne.s32.totalorder %s157, %s159
      %p163 = scmp.eq.s32.totalorder %s18, 0
      %p164 = por %p162, %p163
      %p165 = scmp.ne.s32.totalorder %s157, %s159
      %p166 = scmp.eq.s32.totalorder %s23, 2
      %p167 = por %p165, %p166
      %p168 = scmp.ne.s32.totalorder %s159, %s160
      %p169 = scmp.eq.s32.totalorder %s23, 0
      %p170 = por %p168, %p169
      %p171 = scmp.ne.s32.totalorder %s159, %s160
      %p172 = scmp.eq.s32.totalorder %s24, 2
      %p173 = por %p171, %p172
      %p175 = scmp.ne.s32.totalorder %s160, %s174
      %p176 = scmp.eq.s32.totalorder %s24, 0
      %p177 = por %p175, %p176
      %s178 = ssub.s32 %s18, %s25
      %p179 = scmp.eq.s32.totalorder %s178, 0
      %s181 = sadd.s32 %s180, 1
      %s182 = scalar_select %p179, %s180, %s181
      %p185 = pneg %p179
      %p186 = scmp.eq.s32.totalorder %s18, 2
      %p187 = por %p185, %p186
      %p188 = scmp.ne.s32.totalorder %s180, %s183
      %p189 = scmp.eq.s32.totalorder %s18, 0
      %p190 = por %p188, %p189
      %p191 = scmp.ne.s32.totalorder %s180, %s183
      %p192 = scmp.eq.s32.totalorder %s23, 2
      %p193 = por %p191, %p192
      %p194 = scmp.ne.s32.totalorder %s183, %s184
      %p195 = scmp.eq.s32.totalorder %s23, 0
      %p196 = por %p194, %p195
      %p197 = scmp.ne.s32.totalorder %s183, %s184
      %p198 = scmp.eq.s32.totalorder %s24, 2
      %p199 = por %p197, %p198
      %p201 = scmp.ne.s32.totalorder %s184, %s200
      %p202 = scmp.eq.s32.totalorder %s24, 0
      %p203 = por %p201, %p202
      %p204 = scmp.le.s32.totalorder 1, %s18
      %p205 = scmp.lt.s32.totalorder %s18, 4
      %p206 = pnand %p204, %p205
      %p207 = pneg %p206
      // Predicated region
      $region9: #{tpu_custom_call.1} parent=5 // pred_check
        _
      $region10: #{tpu_custom_call.1} parent=5 // pred_check_branch
        %209 = sbr.rel (%p206) target = $region12
      $region11: #{tpu_custom_call.1} parent=5 // pred_region
        %s210 = ssub.s32 %s18, 1
        // Predicated region
        $region13: #{tpu_custom_call.1} parent=11 // pred_check
          %p211 = pneg %p65
        $region14: #{tpu_custom_call.1} parent=11 // pred_check_branch
          %213 = sbr.rel (%p211) target = $region16
        $region15: #{tpu_custom_call.1} parent=11 // pred_region
          _
        $region16: #{tpu_custom_call.1} parent=11 // pred_fallthru
          _
        // Predicated region
        $region17: #{tpu_custom_call.1} parent=11 // pred_check
          %p214 = pneg %p86
        $region18: #{tpu_custom_call.1} parent=11 // pred_check_branch
          %216 = sbr.rel (%p214) target = $region20
        $region19: #{tpu_custom_call.1} parent=11 // pred_region
          _
        $region20: #{tpu_custom_call.1} parent=11 // pred_fallthru
          _
        // Predicated region
        $region21: #{tpu_custom_call.1} parent=11 // pred_check
          %p217 = pneg %p107
        $region22: #{tpu_custom_call.1} parent=11 // pred_check_branch
          %219 = sbr.rel (%p217) target = $region24
        $region23: #{tpu_custom_call.1} parent=11 // pred_region
          _
        $region24: #{tpu_custom_call.1} parent=11 // pred_fallthru
          _
        // Predicated region
        $region25: #{tpu_custom_call.1} parent=11 // pred_check
          %p220 = pneg %p128
        $region26: #{tpu_custom_call.1} parent=11 // pred_check_branch
          %222 = sbr.rel (%p220) target = $region28
        $region27: #{tpu_custom_call.1} parent=11 // pred_region
          _
        $region28: #{tpu_custom_call.1} parent=11 // pred_fallthru
          _
        // Predicated region
        $region29: #{tpu_custom_call.1} parent=11 // pred_check
          %p223 = pneg %p149
        $region30: #{tpu_custom_call.1} parent=11 // pred_check_branch
          %225 = sbr.rel (%p223) target = $region32
        $region31: #{tpu_custom_call.1} parent=11 // pred_region
          _
        $region32: #{tpu_custom_call.1} parent=11 // pred_fallthru
          _
        // Predicated region
        $region33: #{tpu_custom_call.1} parent=11 // pred_check
          %p226 = pneg %p170
        $region34: #{tpu_custom_call.1} parent=11 // pred_check_branch
          %228 = sbr.rel (%p226) target = $region36
        $region35: #{tpu_custom_call.1} parent=11 // pred_region
          _
        $region36: #{tpu_custom_call.1} parent=11 // pred_fallthru
          _
      $region12: #{tpu_custom_call.1} parent=5 // pred_fallthru
        _
      %p229 = scmp.lt.s32.totalorder %s18, 3
      // Predicated region
      $region37: #{tpu_custom_call.1} parent=5 // pred_check
        %p230 = pneg %p229
      $region38: #{tpu_custom_call.1} parent=5 // pred_check_branch
        %232 = sbr.rel (%p230) target = $region40
      $region39: #{tpu_custom_call.1} parent=5 // pred_region
        // Predicated region
        $region41: #{tpu_custom_call.1} parent=39 // pred_check
          %p233 = pneg %p38
        $region42: #{tpu_custom_call.1} parent=39 // pred_check_branch
          %235 = sbr.rel (%p233) target = $region44
        $region43: #{tpu_custom_call.1} parent=39 // pred_region
          %p236 = scmp.lt.s32.totalorder %s18, 2
          %s237 = scalar_select %p236, %s18, 2
          %s238 = smul.addr %s237, 2
          %s239 = scalar_lea.vmem %s0, %s238
        $region44: #{tpu_custom_call.1} parent=39 // pred_fallthru
          _
      $region40: #{tpu_custom_call.1} parent=5 // pred_fallthru
        _
      %p240 = scmp.le.s32.totalorder 1, %s18
      %p241 = scmp.lt.s32.totalorder %s18, 4
      %p242 = pnand %p240, %p241
      %p243 = pneg %p242
      // Predicated region
      $region45: #{tpu_custom_call.1} parent=5 // pred_check
        _
      $region46: #{tpu_custom_call.1} parent=5 // pred_check_branch
        %245 = sbr.rel (%p242) target = $region48
      $region47: #{tpu_custom_call.1} parent=5 // pred_region
        %s246 = ssub.s32 %s18, 1
        %p247 = scmp.lt.s32.totalorder %s23, 2
        %s248 = scalar_select %p247, %s23, 2
        %s249 = smul.addr %s248, 2
        %s250 = scalar_lea.vmem %s0, %s249
        %p251 = pneg %p44
        %p252 = pneg %p41
        %p253 = pneg %p65
        %p254 = pneg %p62
        %p255 = pneg %p86
        %p256 = pneg %p83
        %p257 = pneg %p107
        %p258 = pneg %p104
        %p259 = pneg %p128
        %p260 = pneg %p125
        %p261 = pneg %p149
        %p262 = pneg %p146
        %p263 = pneg %p170
        %p264 = pneg %p167
        %p265 = pneg %p196
        %p266 = pneg %p193
        %s267 = sand.u32 %s183, 1
        %s268 = scalar_lea.sflag [#allocation4], %s267
        %s269 = sand.u32 %s183, 1
        %s270 = scalar_lea.vmem [#allocation3], %s269
        %p271 = scmp.lt.s32.totalorder %s23, 2
        %s272 = scalar_select %p271, %s23, 2
        %s273 = smul.addr %s272, 2
        %s274 = scalar_lea.vmem %s0, %s273
        %v275 = vld [vmem:[%s1] sm:$0xff]
        %v276 = vld [vmem:[%s1 + $0x8] sm:$0xff]
        %v277 = vld [vmem:[%s1 + $0x10] sm:$0xff]
        %v278 = vld [vmem:[%s1 + $0x18] sm:$0xff]
        %v279 = vld [vmem:[%s274] sm:$0x3]
        %v280 = vld [vmem:[%s2] sm:$0xff]
        %v281 = vld [vmem:[%s2 + $0x8] sm:$0xff]
        %v282 = vld [vmem:[%s2 + $0x10] sm:$0xff]
        %v283 = vld [vmem:[%s2 + $0x18] sm:$0xff]
        %285 = vset.pattern.permute.xlu0 0
        %286 = vperm.xlu0 %285, %v280
        %v287 = vpop.permute.xlu0 %286
        %290 = vset.pattern.permute.xlu0 0
        %291 = vperm.xlu0 %290, %v281
        %v292 = vpop.permute.xlu0 %291
        %295 = vset.pattern.permute.xlu0 0
        %296 = vperm.xlu0 %295, %v282
        %v297 = vpop.permute.xlu0 %296
        %300 = vset.pattern.permute.xlu0 0
        %301 = vperm.xlu0 %300, %v283
        %v302 = vpop.permute.xlu0 %301
        %vm304 = vcmask 15360
        %v306 = vsel %vm304, %v275, 0
        %v309 = vsel %vm304, %v276, 0
        %v312 = vsel %vm304, %v277, 0
        %v315 = vsel %vm304, %v278, 0
        %vm317 = vcmask 1041408
        %v319 = vsel %vm317, %v279, 0
        %321 = vmatprep.subr.mxu0 0.0
        %322 = vmatpush1.msra.mxu0 0.0
        %323 = vmatprep.subr.mxu0 0.0
        %324 = vmatpush1.msra.mxu0 0.0
        %325 = vmatprep.subr.mxu0 0.0
        %326 = vmatpush1.msra.mxu0 0.0
        %327 = vmatprep.subr.mxu0 0.0
        %328 = vmatpush1.msra.mxu0 0.0
        %329 = vmatprep.subr.mxu0 0.0
        %330 = vmatpush1.msra.mxu0 0.0
        %331 = vmatprep.subr.mxu0 0.0
        %332 = vmatpush1.msra.mxu0 0.0
        %333 = vmatprep.subr.mxu0 0.0
        %334 = vmatpush1.msra.mxu0 0.0
        %335 = vmatprep.subr.mxu0 0.0
        %336 = vmatpush1.msra.mxu0 0.0
        %337 = vmatprep.subr.mxu0 0.0
        %338 = vmatpush1.msra.mxu0 0.0
        %339 = vmatprep.subr.mxu0 0.0
        %340 = vmatpush1.msra.mxu0 0.0
        %341 = vmatprep.subr.mxu0 0.0
        %342 = vmatpush1.msra.mxu0 0.0
        %343 = vmatprep.subr.mxu0 0.0
        %344 = vmatpush1.msra.mxu0 0.0
        %345 = vmatprep.subr.mxu0 0.0
        %346 = vmatpush1.msra.mxu0 0.0
        %347 = vmatprep.subr.mxu0 0.0
        %348 = vmatpush1.msra.mxu0 0.0
        %349 = vmatprep.subr.mxu0 0.0
        %350 = vmatpush1.msra.mxu0 0.0
        %351 = vmatprep.subr.mxu0 0.0
        %352 = vmatpush1.msra.mxu0 %v319
        %353 = vmatprep.subr.mxu0 0.0
        %354 = vmatpush2.msra.mxu0 0.0
        %355 = vmatprep.subr.mxu0 0.0
        %356 = vmatpush2.msra.mxu0 0.0
        %357 = vmatprep.subr.mxu0 0.0
        %358 = vmatpush2.msra.mxu0 0.0
        %359 = vmatprep.subr.mxu0 0.0
        %360 = vmatpush2.msra.mxu0 0.0
        %361 = vmatprep.subr.mxu0 0.0
        %362 = vmatpush2.msra.mxu0 0.0
        %363 = vmatprep.subr.mxu0 0.0
        %364 = vmatpush2.msra.mxu0 0.0
        %365 = vmatprep.subr.mxu0 0.0
        %366 = vmatpush2.msra.mxu0 0.0
        %367 = vmatprep.subr.mxu0 0.0
        %368 = vmatpush2.msra.mxu0 0.0
        %369 = vmatprep.subr.mxu0 0.0
        %370 = vmatpush2.msra.mxu0 0.0
        %371 = vmatprep.subr.mxu0 0.0
        %372 = vmatpush2.msra.mxu0 0.0
        %373 = vmatprep.subr.mxu0 0.0
        %374 = vmatpush2.msra.mxu0 0.0
        %375 = vmatprep.subr.mxu0 0.0
        %376 = vmatpush2.msra.mxu0 0.0
        %377 = vmatprep.subr.mxu0 0.0
        %378 = vmatpush2.msra.mxu0 0.0
        %379 = vmatprep.subr.mxu0 0.0
        %380 = vmatpush2.msra.mxu0 0.0
        %381 = vmatprep.subr.mxu0 0.0
        %382 = vmatpush2.msra.mxu0 0.0
        %383 = vmatprep.subr.mxu0 0.0
        %384 = vmatpush2.msra.mxu0 0.0
        %385 = vmatprep.mubr.f32.mxu0 0.0
        %386 = vmatmul.mubr.f32.gmra.mxu0 %v306
        %v387 = vpop.f32.mrf.mxu0
        %v388 = vadd.f32 %v287, %v387
        %v389 = vpop.f32.mrf.mxu0
        %390 = vmatprep.mubr.f32.mxu0 0.0
        %391 = vmatmul.mubr.f32.gmra.mxu0 %v309
        %v392 = vpop.f32.mrf.mxu0
        %v393 = vadd.f32 %v292, %v392
        %v394 = vpop.f32.mrf.mxu0
        %395 = vmatprep.mubr.f32.mxu0 0.0
        %396 = vmatmul.mubr.f32.gmra.mxu0 %v312
        %v397 = vpop.f32.mrf.mxu0
        %v398 = vadd.f32 %v297, %v397
        %v399 = vpop.f32.mrf.mxu0
        %400 = vmatprep.mubr.f32.mxu0 0.0
        %401 = vmatmul.mubr.f32.gmra.mxu0 %v315
        %v402 = vpop.f32.mrf.mxu0
        %v403 = vadd.f32 %v302, %v402
        %v404 = vpop.f32.mrf.mxu0
        %405 = vdwg.mxu0
        %v406 = vtanh.pop %v388
        %v407 = vtanh.pop %v393
        %v408 = vtanh.pop %v398
        %v409 = vtanh.pop %v403
        %v410 = vld [vmem:[%s3] sm:$0xff]
        %v411 = vld [vmem:[%s3 + $0x8] sm:$0xff]
        %v412 = vld [vmem:[%s3 + $0x10] sm:$0xff]
        %v413 = vld [vmem:[%s3 + $0x18] sm:$0xff]
        %v414 = vld [vmem:[%s4] sm:$0xff]
        %v415 = vld [vmem:[%s4 + $0x8] sm:$0xff]
        %v416 = vld [vmem:[%s4 + $0x10] sm:$0xff]
        %v417 = vld [vmem:[%s4 + $0x18] sm:$0xff]
        %419 = vset.pattern.permute.xlu0 0
        %420 = vperm.xlu0 %419, %v414
        %v421 = vpop.permute.xlu0 %420
        %424 = vset.pattern.permute.xlu0 0
        %425 = vperm.xlu0 %424, %v415
        %v426 = vpop.permute.xlu0 %425
        %429 = vset.pattern.permute.xlu0 0
        %430 = vperm.xlu0 %429, %v416
        %v431 = vpop.permute.xlu0 %430
        %434 = vset.pattern.permute.xlu0 0
        %435 = vperm.xlu0 %434, %v417
        %v436 = vpop.permute.xlu0 %435
        %vm438 = vcmask 261120
        %v440 = vsel %vm438, %v410, 0
        %v443 = vsel %vm438, %v411, 0
        %v446 = vsel %vm438, %v412, 0
        %v449 = vsel %vm438, %v413, 0
        %451 = vmatprep.subr.mxu0 0.0
        %452 = vmatpush1.msra.mxu0 0.0
        %453 = vmatprep.subr.mxu0 0.0
        %454 = vmatpush1.msra.mxu0 0.0
        %455 = vmatprep.subr.mxu0 0.0
        %456 = vmatpush1.msra.mxu0 0.0
        %457 = vmatprep.subr.mxu0 0.0
        %458 = vmatpush1.msra.mxu0 0.0
        %459 = vmatprep.subr.mxu0 0.0
        %460 = vmatpush1.msra.mxu0 0.0
        %461 = vmatprep.subr.mxu0 0.0
        %462 = vmatpush1.msra.mxu0 0.0
        %463 = vmatprep.subr.mxu0 0.0
        %464 = vmatpush1.msra.mxu0 0.0
        %465 = vmatprep.subr.mxu0 0.0
        %466 = vmatpush1.msra.mxu0 0.0
        %467 = vmatprep.subr.mxu0 0.0
        %468 = vmatpush1.msra.mxu0 0.0
        %469 = vmatprep.subr.mxu0 0.0
        %470 = vmatpush1.msra.mxu0 0.0
        %471 = vmatprep.subr.mxu0 0.0
        %472 = vmatpush1.msra.mxu0 0.0
        %473 = vmatprep.subr.mxu0 0.0
        %474 = vmatpush1.msra.mxu0 0.0
        %475 = vmatprep.subr.mxu0 0.0
        %476 = vmatpush1.msra.mxu0 %v409
        %477 = vmatprep.subr.mxu0 0.0
        %478 = vmatpush1.msra.mxu0 %v408
        %479 = vmatprep.subr.mxu0 0.0
        %480 = vmatpush1.msra.mxu0 %v407
        %481 = vmatprep.subr.mxu0 0.0
        %482 = vmatpush1.msra.mxu0 %v406
        %483 = vmatprep.subr.mxu0 0.0
        %484 = vmatpush2.msra.mxu0 0.0
        %485 = vmatprep.subr.mxu0 0.0
        %486 = vmatpush2.msra.mxu0 0.0
        %487 = vmatprep.subr.mxu0 0.0
        %488 = vmatpush2.msra.mxu0 0.0
        %489 = vmatprep.subr.mxu0 0.0
        %490 = vmatpush2.msra.mxu0 0.0
        %491 = vmatprep.subr.mxu0 0.0
        %492 = vmatpush2.msra.mxu0 0.0
        %493 = vmatprep.subr.mxu0 0.0
        %494 = vmatpush2.msra.mxu0 0.0
        %495 = vmatprep.subr.mxu0 0.0
        %496 = vmatpush2.msra.mxu0 0.0
        %497 = vmatprep.subr.mxu0 0.0
        %498 = vmatpush2.msra.mxu0 0.0
        %499 = vmatprep.subr.mxu0 0.0
        %500 = vmatpush2.msra.mxu0 0.0
        %501 = vmatprep.subr.mxu0 0.0
        %502 = vmatpush2.msra.mxu0 0.0
        %503 = vmatprep.subr.mxu0 0.0
        %504 = vmatpush2.msra.mxu0 0.0
        %505 = vmatprep.subr.mxu0 0.0
        %506 = vmatpush2.msra.mxu0 0.0
        %507 = vmatprep.subr.mxu0 0.0
        %508 = vmatpush2.msra.mxu0 0.0
        %509 = vmatprep.subr.mxu0 0.0
        %510 = vmatpush2.msra.mxu0 0.0
        %511 = vmatprep.subr.mxu0 0.0
        %512 = vmatpush2.msra.mxu0 0.0
        %513 = vmatprep.subr.mxu0 0.0
        %514 = vmatpush2.msra.mxu0 0.0
        %515 = vmatprep.mubr.f32.mxu0 0.0
        %516 = vmatmul.mubr.f32.gmra.mxu0 %v440
        %v517 = vpop.f32.mrf.mxu0
        %v518 = vadd.f32 %v421, %v517
        %v519 = vpop.f32.mrf.mxu0
        %520 = vmatprep.mubr.f32.mxu0 0.0
        %521 = vmatmul.mubr.f32.gmra.mxu0 %v443
        %v522 = vpop.f32.mrf.mxu0
        %v523 = vadd.f32 %v426, %v522
        %v524 = vpop.f32.mrf.mxu0
        %525 = vmatprep.mubr.f32.mxu0 0.0
        %526 = vmatmul.mubr.f32.gmra.mxu0 %v446
        %v527 = vpop.f32.mrf.mxu0
        %v528 = vadd.f32 %v431, %v527
        %v529 = vpop.f32.mrf.mxu0
        %530 = vmatprep.mubr.f32.mxu0 0.0
        %531 = vmatmul.mubr.f32.gmra.mxu0 %v449
        %v532 = vpop.f32.mrf.mxu0
        %v533 = vadd.f32 %v436, %v532
        %v534 = vpop.f32.mrf.mxu0
        %535 = vdwg.mxu0
        %v536 = vtanh.pop %v518
        %v537 = vtanh.pop %v523
        %v538 = vtanh.pop %v528
        %v539 = vtanh.pop %v533
        %540 = vmatprep.subr.mxu0 0.0
        %541 = vmatpush1.msra.mxu0 0.0
        %542 = vmatprep.subr.mxu0 0.0
        %543 = vmatpush1.msra.mxu0 0.0
        %544 = vmatprep.subr.mxu0 0.0
        %545 = vmatpush1.msra.mxu0 0.0
        %546 = vmatprep.subr.mxu0 0.0
        %547 = vmatpush1.msra.mxu0 0.0
        %548 = vmatprep.subr.mxu0 0.0
        %549 = vmatpush1.msra.mxu0 0.0
        %550 = vmatprep.subr.mxu0 0.0
        %551 = vmatpush1.msra.mxu0 0.0
        %552 = vmatprep.subr.mxu0 0.0
        %553 = vmatpush1.msra.mxu0 0.0
        %554 = vmatprep.subr.mxu0 0.0
        %555 = vmatpush1.msra.mxu0 0.0
        %556 = vmatprep.subr.mxu0 0.0
        %557 = vmatpush1.msra.mxu0 0.0
        %558 = vmatprep.subr.mxu0 0.0
        %559 = vmatpush1.msra.mxu0 0.0
        %560 = vmatprep.subr.mxu0 0.0
        %561 = vmatpush1.msra.mxu0 0.0
        %562 = vmatprep.subr.mxu0 0.0
        %563 = vmatpush1.msra.mxu0 0.0
        %564 = vmatprep.subr.mxu0 0.0
        %565 = vmatpush1.msra.mxu0 %v539
        %566 = vmatprep.subr.mxu0 0.0
        %567 = vmatpush1.msra.mxu0 %v538
        %568 = vmatprep.subr.mxu0 0.0
        %569 = vmatpush1.msra.mxu0 %v537
        %570 = vmatprep.subr.mxu0 0.0
        %571 = vmatpush1.msra.mxu0 %v536
        %572 = vmatprep.subr.mxu0 0.0
        %573 = vmatpush2.msra.mxu0 0.0
        %574 = vmatprep.subr.mxu0 0.0
        %575 = vmatpush2.msra.mxu0 0.0
        %576 = vmatprep.subr.mxu0 0.0
        %577 = vmatpush2.msra.mxu0 0.0
        %578 = vmatprep.subr.mxu0 0.0
        %579 = vmatpush2.msra.mxu0 0.0
        %580 = vmatprep.subr.mxu0 0.0
        %581 = vmatpush2.msra.mxu0 0.0
        %582 = vmatprep.subr.mxu0 0.0
        %583 = vmatpush2.msra.mxu0 0.0
        %584 = vmatprep.subr.mxu0 0.0
        %585 = vmatpush2.msra.mxu0 0.0
        %586 = vmatprep.subr.mxu0 0.0
        %587 = vmatpush2.msra.mxu0 0.0
        %588 = vmatprep.subr.mxu0 0.0
        %589 = vmatpush2.msra.mxu0 0.0
        %590 = vmatprep.subr.mxu0 0.0
        %591 = vmatpush2.msra.mxu0 0.0
        %592 = vmatprep.subr.mxu0 0.0
        %593 = vmatpush2.msra.mxu0 0.0
        %594 = vmatprep.subr.mxu0 0.0
        %595 = vmatpush2.msra.mxu0 0.0
        %596 = vmatprep.subr.mxu0 0.0
        %597 = vmatpush2.msra.mxu0 0.0
        %598 = vmatprep.subr.mxu0 0.0
        %599 = vmatpush2.msra.mxu0 0.0
        %600 = vmatprep.subr.mxu0 0.0
        %601 = vmatpush2.msra.mxu0 0.0
        %602 = vmatprep.subr.mxu0 0.0
        %603 = vmatpush2.msra.mxu0 0.0
        %604 = vmatprep.mubr.f32.mxu0 0.0
        %605 = vmatmul.mubr.f32.gmra.mxu0 %v440
        %v606 = vpop.f32.mrf.mxu0
        %v607 = vadd.f32 %v421, %v606
        %v608 = vpop.f32.mrf.mxu0
        %609 = vmatprep.mubr.f32.mxu0 0.0
        %610 = vmatmul.mubr.f32.gmra.mxu0 %v443
        %v611 = vpop.f32.mrf.mxu0
        %v612 = vadd.f32 %v426, %v611
        %v613 = vpop.f32.mrf.mxu0
        %614 = vmatprep.mubr.f32.mxu0 0.0
        %615 = vmatmul.mubr.f32.gmra.mxu0 %v446
        %v616 = vpop.f32.mrf.mxu0
        %v617 = vadd.f32 %v431, %v616
        %v618 = vpop.f32.mrf.mxu0
        %619 = vmatprep.mubr.f32.mxu0 0.0
        %620 = vmatmul.mubr.f32.gmra.mxu0 %v449
        %v621 = vpop.f32.mrf.mxu0
        %v622 = vadd.f32 %v436, %v621
        %v623 = vpop.f32.mrf.mxu0
        %624 = vdwg.mxu0
        %v625 = vtanh.pop %v607
        %v626 = vtanh.pop %v612
        %v627 = vtanh.pop %v617
        %v628 = vtanh.pop %v622
        %629 = vmatprep.subr.mxu0 0.0
        %630 = vmatpush1.msra.mxu0 0.0
        %631 = vmatprep.subr.mxu0 0.0
        %632 = vmatpush1.msra.mxu0 0.0
        %633 = vmatprep.subr.mxu0 0.0
        %634 = vmatpush1.msra.mxu0 0.0
        %635 = vmatprep.subr.mxu0 0.0
        %636 = vmatpush1.msra.mxu0 0.0
        %637 = vmatprep.subr.mxu0 0.0
        %638 = vmatpush1.msra.mxu0 0.0
        %639 = vmatprep.subr.mxu0 0.0
        %640 = vmatpush1.msra.mxu0 0.0
        %641 = vmatprep.subr.mxu0 0.0
        %642 = vmatpush1.msra.mxu0 0.0
        %643 = vmatprep.subr.mxu0 0.0
        %644 = vmatpush1.msra.mxu0 0.0
        %645 = vmatprep.subr.mxu0 0.0
        %646 = vmatpush1.msra.mxu0 0.0
        %647 = vmatprep.subr.mxu0 0.0
        %648 = vmatpush1.msra.mxu0 0.0
        %649 = vmatprep.subr.mxu0 0.0
        %650 = vmatpush1.msra.mxu0 0.0
        %651 = vmatprep.subr.mxu0 0.0
        %652 = vmatpush1.msra.mxu0 0.0
        %653 = vmatprep.subr.mxu0 0.0
        %654 = vmatpush1.msra.mxu0 %v628
        %655 = vmatprep.subr.mxu0 0.0
        %656 = vmatpush1.msra.mxu0 %v627
        %657 = vmatprep.subr.mxu0 0.0
        %658 = vmatpush1.msra.mxu0 %v626
        %659 = vmatprep.subr.mxu0 0.0
        %660 = vmatpush1.msra.mxu0 %v625
        %661 = vmatprep.subr.mxu0 0.0
        %662 = vmatpush2.msra.mxu0 0.0
        %663 = vmatprep.subr.mxu0 0.0
        %664 = vmatpush2.msra.mxu0 0.0
        %665 = vmatprep.subr.mxu0 0.0
        %666 = vmatpush2.msra.mxu0 0.0
        %667 = vmatprep.subr.mxu0 0.0
        %668 = vmatpush2.msra.mxu0 0.0
        %669 = vmatprep.subr.mxu0 0.0
        %670 = vmatpush2.msra.mxu0 0.0
        %671 = vmatprep.subr.mxu0 0.0
        %672 = vmatpush2.msra.mxu0 0.0
        %673 = vmatprep.subr.mxu0 0.0
        %674 = vmatpush2.msra.mxu0 0.0
        %675 = vmatprep.subr.mxu0 0.0
        %676 = vmatpush2.msra.mxu0 0.0
        %677 = vmatprep.subr.mxu0 0.0
        %678 = vmatpush2.msra.mxu0 0.0
        %679 = vmatprep.subr.mxu0 0.0
        %680 = vmatpush2.msra.mxu0 0.0
        %681 = vmatprep.subr.mxu0 0.0
        %682 = vmatpush2.msra.mxu0 0.0
        %683 = vmatprep.subr.mxu0 0.0
        %684 = vmatpush2.msra.mxu0 0.0
        %685 = vmatprep.subr.mxu0 0.0
        %686 = vmatpush2.msra.mxu0 0.0
        %687 = vmatprep.subr.mxu0 0.0
        %688 = vmatpush2.msra.mxu0 0.0
        %689 = vmatprep.subr.mxu0 0.0
        %690 = vmatpush2.msra.mxu0 0.0
        %691 = vmatprep.subr.mxu0 0.0
        %692 = vmatpush2.msra.mxu0 0.0
        %693 = vmatprep.mubr.f32.mxu0 0.0
        %694 = vmatmul.mubr.f32.gmra.mxu0 %v440
        %v695 = vpop.f32.mrf.mxu0
        %v696 = vadd.f32 %v421, %v695
        %v697 = vpop.f32.mrf.mxu0
        %698 = vmatprep.mubr.f32.mxu0 0.0
        %699 = vmatmul.mubr.f32.gmra.mxu0 %v443
        %v700 = vpop.f32.mrf.mxu0
        %v701 = vadd.f32 %v426, %v700
        %v702 = vpop.f32.mrf.mxu0
        %703 = vmatprep.mubr.f32.mxu0 0.0
        %704 = vmatmul.mubr.f32.gmra.mxu0 %v446
        %v705 = vpop.f32.mrf.mxu0
        %v706 = vadd.f32 %v431, %v705
        %v707 = vpop.f32.mrf.mxu0
        %708 = vmatprep.mubr.f32.mxu0 0.0
        %709 = vmatmul.mubr.f32.gmra.mxu0 %v449
        %v710 = vpop.f32.mrf.mxu0
        %v711 = vadd.f32 %v436, %v710
        %v712 = vpop.f32.mrf.mxu0
        %713 = vdwg.mxu0
        %v714 = vtanh.pop %v696
        %v715 = vtanh.pop %v701
        %v716 = vtanh.pop %v706
        %v717 = vtanh.pop %v711
        %718 = vmatprep.subr.mxu0 0.0
        %719 = vmatpush1.msra.mxu0 0.0
        %720 = vmatprep.subr.mxu0 0.0
        %721 = vmatpush1.msra.mxu0 0.0
        %722 = vmatprep.subr.mxu0 0.0
        %723 = vmatpush1.msra.mxu0 0.0
        %724 = vmatprep.subr.mxu0 0.0
        %725 = vmatpush1.msra.mxu0 0.0
        %726 = vmatprep.subr.mxu0 0.0
        %727 = vmatpush1.msra.mxu0 0.0
        %728 = vmatprep.subr.mxu0 0.0
        %729 = vmatpush1.msra.mxu0 0.0
        %730 = vmatprep.subr.mxu0 0.0
        %731 = vmatpush1.msra.mxu0 0.0
        %732 = vmatprep.subr.mxu0 0.0
        %733 = vmatpush1.msra.mxu0 0.0
        %734 = vmatprep.subr.mxu0 0.0
        %735 = vmatpush1.msra.mxu0 0.0
        %736 = vmatprep.subr.mxu0 0.0
        %737 = vmatpush1.msra.mxu0 0.0
        %738 = vmatprep.subr.mxu0 0.0
        %739 = vmatpush1.msra.mxu0 0.0
        %740 = vmatprep.subr.mxu0 0.0
        %741 = vmatpush1.msra.mxu0 0.0
        %742 = vmatprep.subr.mxu0 0.0
        %743 = vmatpush1.msra.mxu0 %v717
        %744 = vmatprep.subr.mxu0 0.0
        %745 = vmatpush1.msra.mxu0 %v716
        %746 = vmatprep.subr.mxu0 0.0
        %747 = vmatpush1.msra.mxu0 %v715
        %748 = vmatprep.subr.mxu0 0.0
        %749 = vmatpush1.msra.mxu0 %v714
        %750 = vmatprep.subr.mxu0 0.0
        %751 = vmatpush2.msra.mxu0 0.0
        %752 = vmatprep.subr.mxu0 0.0
        %753 = vmatpush2.msra.mxu0 0.0
        %754 = vmatprep.subr.mxu0 0.0
        %755 = vmatpush2.msra.mxu0 0.0
        %756 = vmatprep.subr.mxu0 0.0
        %757 = vmatpush2.msra.mxu0 0.0
        %758 = vmatprep.subr.mxu0 0.0
        %759 = vmatpush2.msra.mxu0 0.0
        %760 = vmatprep.subr.mxu0 0.0
        %761 = vmatpush2.msra.mxu0 0.0
        %762 = vmatprep.subr.mxu0 0.0
        %763 = vmatpush2.msra.mxu0 0.0
        %764 = vmatprep.subr.mxu0 0.0
        %765 = vmatpush2.msra.mxu0 0.0
        %766 = vmatprep.subr.mxu0 0.0
        %767 = vmatpush2.msra.mxu0 0.0
        %768 = vmatprep.subr.mxu0 0.0
        %769 = vmatpush2.msra.mxu0 0.0
        %770 = vmatprep.subr.mxu0 0.0
        %771 = vmatpush2.msra.mxu0 0.0
        %772 = vmatprep.subr.mxu0 0.0
        %773 = vmatpush2.msra.mxu0 0.0
        %774 = vmatprep.subr.mxu0 0.0
        %775 = vmatpush2.msra.mxu0 0.0
        %776 = vmatprep.subr.mxu0 0.0
        %777 = vmatpush2.msra.mxu0 0.0
        %778 = vmatprep.subr.mxu0 0.0
        %779 = vmatpush2.msra.mxu0 0.0
        %780 = vmatprep.subr.mxu0 0.0
        %781 = vmatpush2.msra.mxu0 0.0
        %782 = vmatprep.mubr.f32.mxu0 0.0
        %783 = vmatmul.mubr.f32.gmra.mxu0 %v440
        %v784 = vpop.f32.mrf.mxu0
        %v785 = vadd.f32 %v421, %v784
        %v786 = vpop.f32.mrf.mxu0
        %787 = vmatprep.mubr.f32.mxu0 0.0
        %788 = vmatmul.mubr.f32.gmra.mxu0 %v443
        %v789 = vpop.f32.mrf.mxu0
        %v790 = vadd.f32 %v426, %v789
        %v791 = vpop.f32.mrf.mxu0
        %792 = vmatprep.mubr.f32.mxu0 0.0
        %793 = vmatmul.mubr.f32.gmra.mxu0 %v446
        %v794 = vpop.f32.mrf.mxu0
        %v795 = vadd.f32 %v431, %v794
        %v796 = vpop.f32.mrf.mxu0
        %797 = vmatprep.mubr.f32.mxu0 0.0
        %798 = vmatmul.mubr.f32.gmra.mxu0 %v449
        %v799 = vpop.f32.mrf.mxu0
        %v800 = vadd.f32 %v436, %v799
        %v801 = vpop.f32.mrf.mxu0
        %802 = vdwg.mxu0
        %v803 = vtanh.pop %v785
        %v804 = vtanh.pop %v790
        %v805 = vtanh.pop %v795
        %v806 = vtanh.pop %v800
        %807 = vmatprep.subr.mxu0 0.0
        %808 = vmatpush1.msra.mxu0 0.0
        %809 = vmatprep.subr.mxu0 0.0
        %810 = vmatpush1.msra.mxu0 0.0
        %811 = vmatprep.subr.mxu0 0.0
        %812 = vmatpush1.msra.mxu0 0.0
        %813 = vmatprep.subr.mxu0 0.0
        %814 = vmatpush1.msra.mxu0 0.0
        %815 = vmatprep.subr.mxu0 0.0
        %816 = vmatpush1.msra.mxu0 0.0
        %817 = vmatprep.subr.mxu0 0.0
        %818 = vmatpush1.msra.mxu0 0.0
        %819 = vmatprep.subr.mxu0 0.0
        %820 = vmatpush1.msra.mxu0 0.0
        %821 = vmatprep.subr.mxu0 0.0
        %822 = vmatpush1.msra.mxu0 0.0
        %823 = vmatprep.subr.mxu0 0.0
        %824 = vmatpush1.msra.mxu0 0.0
        %825 = vmatprep.subr.mxu0 0.0
        %826 = vmatpush1.msra.mxu0 0.0
        %827 = vmatprep.subr.mxu0 0.0
        %828 = vmatpush1.msra.mxu0 0.0
        %829 = vmatprep.subr.mxu0 0.0
        %830 = vmatpush1.msra.mxu0 0.0
        %831 = vmatprep.subr.mxu0 0.0
        %832 = vmatpush1.msra.mxu0 %v806
        %833 = vmatprep.subr.mxu0 0.0
        %834 = vmatpush1.msra.mxu0 %v805
        %835 = vmatprep.subr.mxu0 0.0
        %836 = vmatpush1.msra.mxu0 %v804
        %837 = vmatprep.subr.mxu0 0.0
        %838 = vmatpush1.msra.mxu0 %v803
        %839 = vmatprep.subr.mxu0 0.0
        %840 = vmatpush2.msra.mxu0 0.0
        %841 = vmatprep.subr.mxu0 0.0
        %842 = vmatpush2.msra.mxu0 0.0
        %843 = vmatprep.subr.mxu0 0.0
        %844 = vmatpush2.msra.mxu0 0.0
        %845 = vmatprep.subr.mxu0 0.0
        %846 = vmatpush2.msra.mxu0 0.0
        %847 = vmatprep.subr.mxu0 0.0
        %848 = vmatpush2.msra.mxu0 0.0
        %849 = vmatprep.subr.mxu0 0.0
        %850 = vmatpush2.msra.mxu0 0.0
        %851 = vmatprep.subr.mxu0 0.0
        %852 = vmatpush2.msra.mxu0 0.0
        %853 = vmatprep.subr.mxu0 0.0
        %854 = vmatpush2.msra.mxu0 0.0
        %855 = vmatprep.subr.mxu0 0.0
        %856 = vmatpush2.msra.mxu0 0.0
        %857 = vmatprep.subr.mxu0 0.0
        %858 = vmatpush2.msra.mxu0 0.0
        %859 = vmatprep.subr.mxu0 0.0
        %860 = vmatpush2.msra.mxu0 0.0
        %861 = vmatprep.subr.mxu0 0.0
        %862 = vmatpush2.msra.mxu0 0.0
        %863 = vmatprep.subr.mxu0 0.0
        %864 = vmatpush2.msra.mxu0 0.0
        %865 = vmatprep.subr.mxu0 0.0
        %866 = vmatpush2.msra.mxu0 0.0
        %867 = vmatprep.subr.mxu0 0.0
        %868 = vmatpush2.msra.mxu0 0.0
        %869 = vmatprep.subr.mxu0 0.0
        %870 = vmatpush2.msra.mxu0 0.0
        %871 = vmatprep.mubr.f32.mxu0 0.0
        %872 = vmatmul.mubr.f32.gmra.mxu0 %v440
        %v873 = vpop.f32.mrf.mxu0
        %v874 = vadd.f32 %v421, %v873
        %v875 = vpop.f32.mrf.mxu0
        %876 = vmatprep.mubr.f32.mxu0 0.0
        %877 = vmatmul.mubr.f32.gmra.mxu0 %v443
        %v878 = vpop.f32.mrf.mxu0
        %v879 = vadd.f32 %v426, %v878
        %v880 = vpop.f32.mrf.mxu0
        %881 = vmatprep.mubr.f32.mxu0 0.0
        %882 = vmatmul.mubr.f32.gmra.mxu0 %v446
        %v883 = vpop.f32.mrf.mxu0
        %v884 = vadd.f32 %v431, %v883
        %v885 = vpop.f32.mrf.mxu0
        %886 = vmatprep.mubr.f32.mxu0 0.0
        %887 = vmatmul.mubr.f32.gmra.mxu0 %v449
        %v888 = vpop.f32.mrf.mxu0
        %v889 = vadd.f32 %v436, %v888
        %v890 = vpop.f32.mrf.mxu0
        %891 = vdwg.mxu0
        %v892 = vtanh.pop %v874
        %v893 = vtanh.pop %v879
        %v894 = vtanh.pop %v884
        %v895 = vtanh.pop %v889
        %v896 = vld [vmem:[%s5] sm:$0x1]
        %v897 = vld [vmem:[#allocation2] sm:$0x1]
        %899 = vset.pattern.permute.xlu0 0
        %900 = vperm.xlu0 %899, %v897
        %v901 = vpop.permute.xlu0 %900
        %v903 = vlaneseq
        %v904 = vshrl.u32 %v903, 7
        %v905 = vsub.s32 0, %v904
        %v906 = vrot.slane %v901, %v905
        %v908 = vsel %vm438, %v896, 0
        %910 = vmatprep.subr.mxu0 0.0
        %911 = vmatpush1.msra.mxu0 0.0
        %912 = vmatprep.subr.mxu0 0.0
        %913 = vmatpush1.msra.mxu0 0.0
        %914 = vmatprep.subr.mxu0 0.0
        %915 = vmatpush1.msra.mxu0 0.0
        %916 = vmatprep.subr.mxu0 0.0
        %917 = vmatpush1.msra.mxu0 0.0
        %918 = vmatprep.subr.mxu0 0.0
        %919 = vmatpush1.msra.mxu0 0.0
        %920 = vmatprep.subr.mxu0 0.0
        %921 = vmatpush1.msra.mxu0 0.0
        %922 = vmatprep.subr.mxu0 0.0
        %923 = vmatpush1.msra.mxu0 0.0
        %924 = vmatprep.subr.mxu0 0.0
        %925 = vmatpush1.msra.mxu0 0.0
        %926 = vmatprep.subr.mxu0 0.0
        %927 = vmatpush1.msra.mxu0 0.0
        %928 = vmatprep.subr.mxu0 0.0
        %929 = vmatpush1.msra.mxu0 0.0
        %930 = vmatprep.subr.mxu0 0.0
        %931 = vmatpush1.msra.mxu0 0.0
        %932 = vmatprep.subr.mxu0 0.0
        %933 = vmatpush1.msra.mxu0 0.0
        %934 = vmatprep.subr.mxu0 0.0
        %935 = vmatpush1.msra.mxu0 %v895
        %936 = vmatprep.subr.mxu0 0.0
        %937 = vmatpush1.msra.mxu0 %v894
        %938 = vmatprep.subr.mxu0 0.0
        %939 = vmatpush1.msra.mxu0 %v893
        %940 = vmatprep.subr.mxu0 0.0
        %941 = vmatpush1.msra.mxu0 %v892
        %942 = vmatprep.subr.mxu0 0.0
        %943 = vmatpush2.msra.mxu0 0.0
        %944 = vmatprep.subr.mxu0 0.0
        %945 = vmatpush2.msra.mxu0 0.0
        %946 = vmatprep.subr.mxu0 0.0
        %947 = vmatpush2.msra.mxu0 0.0
        %948 = vmatprep.subr.mxu0 0.0
        %949 = vmatpush2.msra.mxu0 0.0
        %950 = vmatprep.subr.mxu0 0.0
        %951 = vmatpush2.msra.mxu0 0.0
        %952 = vmatprep.subr.mxu0 0.0
        %953 = vmatpush2.msra.mxu0 0.0
        %954 = vmatprep.subr.mxu0 0.0
        %955 = vmatpush2.msra.mxu0 0.0
        %956 = vmatprep.subr.mxu0 0.0
        %957 = vmatpush2.msra.mxu0 0.0
        %958 = vmatprep.subr.mxu0 0.0
        %959 = vmatpush2.msra.mxu0 0.0
        %960 = vmatprep.subr.mxu0 0.0
        %961 = vmatpush2.msra.mxu0 0.0
        %962 = vmatprep.subr.mxu0 0.0
        %963 = vmatpush2.msra.mxu0 0.0
        %964 = vmatprep.subr.mxu0 0.0
        %965 = vmatpush2.msra.mxu0 0.0
        %966 = vmatprep.subr.mxu0 0.0
        %967 = vmatpush2.msra.mxu0 0.0
        %968 = vmatprep.subr.mxu0 0.0
        %969 = vmatpush2.msra.mxu0 0.0
        %970 = vmatprep.subr.mxu0 0.0
        %971 = vmatpush2.msra.mxu0 0.0
        %972 = vmatprep.subr.mxu0 0.0
        %973 = vmatpush2.msra.mxu0 0.0
        %974 = vmatprep.mubr.f32.mxu0 0.0
        %975 = vmatmul.mubr.f32.gmra.mxu0 %v908
        %v976 = vpop.f32.mrf.mxu0
        %v977 = vadd.f32 %v906, %v976
        %v978 = vpop.f32.mrf.mxu0
        %979 = vdwg.mxu0
        %980 = vst [vmem:[%s270] sm:$0x1] %v977
        %s981 = sand.u32 %s183, 1
        %s982 = scalar_lea.sflag [#allocation4], %s981
        %s983 = sand.u32 %s183, 1
        %s984 = scalar_lea.vmem [#allocation3], %s983
        // Predicated region
        $region49: #{tpu_custom_call.1} parent=47 // pred_check
          %p985 = pneg %p193
        $region50: #{tpu_custom_call.1} parent=47 // pred_check_branch
          %987 = sbr.rel (%p985) target = $region52
        $region51: #{tpu_custom_call.1} parent=47 // pred_region
          %s989 = ssub.s32 16, 16
          %990 = vsyncadd %s982, %s989
          %s991 = smul.addr %s23, 16
          %s992 = scalar_lea.hbm %s7, %s991
          %s994 = sshll.u32 %s984, 4
          %s995 = int_to_ptr.vmem [resolvable:$true] %s994
          %997 = dma.vmem_to_hbm [thread:$0]  %s995, 16, %s992, %s982
        $region52: #{tpu_custom_call.1} parent=47 // pred_fallthru
          _
      $region48: #{tpu_custom_call.1} parent=5 // pred_fallthru
        _
      %p998 = scmp.le.s32.totalorder 2, %s18
      // Predicated region
      $region53: #{tpu_custom_call.1} parent=5 // pred_check
        %p999 = pneg %p998
      $region54: #{tpu_custom_call.1} parent=5 // pred_check_branch
        %1001 = sbr.rel (%p999) target = $region56
      $region55: #{tpu_custom_call.1} parent=5 // pred_region
        %s1002 = ssub.s32 %s18, 2
        // Predicated region
        $region57: #{tpu_custom_call.1} parent=55 // pred_check
          %p1003 = pneg %p199
        $region58: #{tpu_custom_call.1} parent=55 // pred_check_branch
          %1005 = sbr.rel (%p1003) target = $region60
        $region59: #{tpu_custom_call.1} parent=55 // pred_region
          %s1006 = sand.u32 %s184, 1
          %s1007 = scalar_lea.sflag [#allocation4], %s1006
          %s1008 = sand.u32 %s184, 1
          %s1009 = scalar_lea.vmem [#allocation3], %s1008
          %1010 = dma.done %s1007, 16
        $region60: #{tpu_custom_call.1} parent=55 // pred_fallthru
          _
      $region56: #{tpu_custom_call.1} parent=5 // pred_fallthru
        _
    $region6: #{tpu_custom_call.1} parent=1 // loop_footer
      %s22 = sadd.s32 1, %s18
    $region7: #{tpu_custom_call.1} parent=1 // loop_footer_branch
      %17 = sbr.rel target = $region3
    $region8: #{tpu_custom_call.1} parent=1 // loop_exit
      _
    %1011 = vsyncpa [#allocation4], 1
    %s1012 = scalar_lea.sflag [#allocation4], 1
    %1013 = vsyncpa %s1012, 1

</llo_original>
